<compile_context>
chip_gen: v7x
topology: tpu7x:2x2x1
jax: 0.10.0
libtpu: 0.0.40
codegen_flags: <defaults>
</compile_context>

<pallas_src>
import functools

import jax
import jax.numpy as jnp
from jax.experimental import pallas as pl
from jax.experimental.pallas import tpu as pltpu

_LANE = 128
_SUBLANE = 8


def _round_up(x, m):
    return (x + m - 1) // m * m


def _point_head_kernel(x_ref,
                       w1_ref, b1_ref,
                       w2_ref, b2_ref,
                       wf_ref, bf_ref,
                       out_ref, *, num_class):
    """One tile of N points through the cls MLP, in transposed orientation.

    x_ref   : (TN, C)   f32 point-feature tile (bf16 cast happens here, not in wrapper)
    w1_ref  : (H1, C)   Linear1 weight with BN1 scale folded in (PyTorch layout)
    b1_ref  : (H1, 1)   folded BatchNorm1 shift (f32)
    w2_ref  : (H2, H1)  Linear2 weight with BN2 scale folded in
    b2_ref  : (H2, 1)   folded BatchNorm2 shift (f32)
    wf_ref  : (R,  H2)  final Linear weight, zero-padded rows (R = roundup(num_class+1, 8))
    bf_ref  : (R,  1)   final Linear bias, padded rows = -inf (f32)
    out_ref : (R,  TN)  rows [0, num_class) = logits, row num_class = sigmoid score
    """
    cdt = w1_ref.dtype

    # Transpose the tile so the point axis stays on the 128-lane axis everywhere and
    # the HBM output is a lane-dense (R, TN) slab.  f32 transpose = XLU work in an
    # otherwise-idle slot; the bf16 cast here saves a full wrapper-side HBM pass.
    xt = jnp.transpose(x_ref[...]).astype(cdt)                           # (C, TN)

    # FC block 1: Linear(no bias, BN scale pre-folded) + BN shift + ReLU (f32 epilogue).
    h = jnp.dot(w1_ref[...], xt, preferred_element_type=jnp.float32)     # (H1, TN)
    h = jnp.maximum(h + b1_ref[...], 0.0)

    # FC block 2.
    h = jnp.dot(w2_ref[...], h.astype(cdt), preferred_element_type=jnp.float32)
    h = jnp.maximum(h + b2_ref[...], 0.0)                                # (H2, TN)

    # Final Linear (row-padded).  Padded rows: zero weight, -inf bias, so the
    # class-axis max below reduces over the real classes only.
    logits = jnp.dot(wf_ref[...], h.astype(cdt), preferred_element_type=jnp.float32)
    logits = logits + bf_ref[...]                                        # (R, TN)

    # point_cls_scores = max(sigmoid(logits)) == sigmoid(max(logits))  (monotone).
    score = jax.nn.sigmoid(jnp.max(logits, axis=0, keepdims=True))       # (1, TN)

    out_ref[...] = logits
    out_ref[pl.ds(num_class, 1), :] = score


def prepare_params(raw, num_class, *, eps=1e-5, compute_dtype=jnp.bfloat16):
    """One-time parameter transform (constants, not a per-call cost).

    - Keeps PyTorch Linear weight layout (out, in): that IS the layout the transposed
      kernel orientation wants.
    - Folds eval-mode BatchNorm1d into the preceding Linear:
        scale = gamma / sqrt(var + eps) multiplied into the weight rows,
        shift = beta - mean * scale kept as a per-channel (H, 1) add.
    - Casts matmul operands to `compute_dtype` (bf16 for the MXU), keeps shifts/bias f32.
    - Pads the final layer to roundup(num_class + 1, 8) rows with zero weights and
      -inf bias (row num_class of the output holds the score).
    """
    prep = {"num_class": num_class}
    out_rows = _round_up(num_class + 1, _SUBLANE)
    prep["out_rows"] = out_rows

    for idx in (1, 2):  # TODO(synk): generalize kernel signature for len(CLS_FC) != 2
        w = raw[f"linear{idx}_w"]                                            # (H, C_in)
        scale = raw[f"bn{idx}_gamma"] / jnp.sqrt(raw[f"bn{idx}_var"] + eps)  # (H,)
        shift = raw[f"bn{idx}_beta"] - raw[f"bn{idx}_mean"] * scale          # (H,)
        prep[f"w{idx}"] = (w * scale[:, None]).astype(compute_dtype)         # (H, C_in)
        prep[f"b{idx}"] = shift[:, None].astype(jnp.float32)                 # (H, 1)

    wf = raw["final_w"]                                # (num_class, H2)
    bf = raw["final_b"]                                # (num_class,)
    h2 = wf.shape[1]
    wf_pad = jnp.zeros((out_rows, h2), jnp.float32).at[:num_class, :].set(wf)
    bf_pad = jnp.full((out_rows, 1), -jnp.inf, jnp.float32).at[:num_class, 0].set(bf)
    prep["wf"] = wf_pad.astype(compute_dtype)
    prep["bf"] = bf_pad
    return prep


def point_head_simple_forward(point_features, prep, *, tile_n=8192, min_grid_steps=4):
    """Runs the PointHeadSimple cls head.

    point_features: (N, C) float32 (cast to the params' compute dtype inside the kernel)
    prep: output of prepare_params().
    Returns: (point_cls_preds (N, num_class) f32, point_cls_scores (N,) f32)
    """
    n, c = point_features.shape
    num_class = prep["num_class"]
    out_rows = prep["out_rows"]

    if n >= _LANE:
        # Big tiles amortize the ~0.35us/grid-step overhead; cap so there are at
        # least `min_grid_steps` steps (v7x has 2 TCs sharded over the parallel axis).
        tile = max(_LANE, min(tile_n, _round_up(pl.cdiv(n, min_grid_steps), _LANE)))
        n_eff = n
        x = point_features            # no wrapper pad / cast: zero extra HBM passes
    else:
        # Tiny point counts: pad once to a single lane-aligned block (negligible).
        tile = _LANE
        n_eff = _LANE
        x = jnp.pad(point_features, ((0, _LANE - n), (0, 0)))

    grid = (pl.cdiv(n_eff, tile),)    # ragged last block: reads padded, writes clipped

    def const_spec(arr):
        nd = arr.ndim
        return pl.BlockSpec(arr.shape, lambda *_, _nd=nd: (0,) * _nd)

    kernel = functools.partial(_point_head_kernel, num_class=num_class)

    out = pl.pallas_call(
        kernel,
        out_shape=jax.ShapeDtypeStruct((out_rows, n_eff), jnp.float32),
        grid_spec=pltpu.PrefetchScalarGridSpec(
            num_scalar_prefetch=0,
            grid=grid,
            in_specs=[
                pl.BlockSpec((tile, c), lambda i: (i, 0)),   # point feature tile
                const_spec(prep["w1"]), const_spec(prep["b1"]),
                const_spec(prep["w2"]), const_spec(prep["b2"]),
                const_spec(prep["wf"]), const_spec(prep["bf"]),
            ],
            out_specs=pl.BlockSpec((out_rows, tile), lambda i: (0, i)),
        ),
        compiler_params=pltpu.CompilerParams(
            dimension_semantics=("parallel",)),
    )(x, prep["w1"], prep["b1"], prep["w2"], prep["b2"], prep["wf"], prep["bf"])

    # Scores are a contiguous row slice; preds get a tiny (num_class, N) -> (N, num_class)
    # post-kernel transpose to match the PyTorch module layout (downstream kernels that
    # prefer the transposed layout can consume `out` directly).
    preds = out[:num_class, :n].T
    scores = out[num_class, :n]
    return preds, scores


def make_raw_params(key, input_channels, cls_fc, num_class):
    """Deterministic synthetic parameters in PyTorch layout (make_fc_layers shapes)."""
    keys = jax.random.split(key, 5 * len(cls_fc) + 2)
    it = iter(keys)
    raw = {}
    c_in = input_channels
    for idx, h in enumerate(cls_fc, start=1):
        raw[f"linear{idx}_w"] = 0.1 * jax.random.normal(next(it), (h, c_in), jnp.float32)
        raw[f"bn{idx}_gamma"] = 1.0 + 0.1 * jax.random.normal(next(it), (h,), jnp.float32)
        raw[f"bn{idx}_beta"] = 0.1 * jax.random.normal(next(it), (h,), jnp.float32)
        raw[f"bn{idx}_mean"] = 0.05 * jax.random.normal(next(it), (h,), jnp.float32)
        raw[f"bn{idx}_var"] = jnp.abs(1.0 + 0.1 * jax.random.normal(next(it), (h,), jnp.float32))
        c_in = h
    raw["final_w"] = 0.1 * jax.random.normal(next(it), (num_class, c_in), jnp.float32)
    raw["final_b"] = 0.1 * jax.random.normal(next(it), (num_class,), jnp.float32)
    return raw


if __name__ == "__main__":
    key = jax.random.PRNGKey(0)
    k_feat, k_params = jax.random.split(key)

    # Small, PointHeadSimple-consistent shapes; N deliberately not a tile multiple
    # so the ragged-last-block path (no wrapper pad) is exercised.
    N, C = 200, 32
    CLS_FC = [32, 32]
    NUM_CLASS = 3

    point_features = jax.random.normal(k_feat, (N, C), jnp.float32)
    raw = make_raw_params(k_params, C, CLS_FC, NUM_CLASS)
    prep = prepare_params(raw, NUM_CLASS)

    preds, scores = point_head_simple_forward(point_features, prep)
    jax.block_until_ready((preds, scores))
    assert preds.shape == (N, NUM_CLASS) and scores.shape == (N,)

    # Reference 1: emulate the kernel's mixed precision (bf16 matmul operands,
    # f32 accumulation + epilogue) -> tight tolerance.
    cdt = prep["w1"].dtype
    xb = point_features.astype(cdt)
    h = jnp.maximum(jnp.dot(xb, prep["w1"].T, preferred_element_type=jnp.float32)
                    + prep["b1"].T, 0.0)
    h = jnp.maximum(jnp.dot(h.astype(cdt), prep["w2"].T, preferred_element_type=jnp.float32)
                    + prep["b2"].T, 0.0)
    ref_logits = (jnp.dot(h.astype(cdt), prep["wf"].T, preferred_element_type=jnp.float32)
                  + prep["bf"].T)[:, :NUM_CLASS]
    ref_scores_mp = jnp.max(jax.nn.sigmoid(ref_logits), axis=-1)
    assert jnp.allclose(preds, ref_logits, atol=1e-2, rtol=1e-2)
    assert jnp.allclose(scores, ref_scores_mp, atol=1e-2, rtol=1e-2)

    # Reference 2: full-f32 PointHeadSimple cls head (eval-mode BatchNorm).
    eps = 1e-5
    hf = point_features
    for idx in (1, 2):
        w = raw[f"linear{idx}_w"]
        scale = raw[f"bn{idx}_gamma"] / jnp.sqrt(raw[f"bn{idx}_var"] + eps)
        shift = raw[f"bn{idx}_beta"] - raw[f"bn{idx}_mean"] * scale
        hf = jnp.maximum((hf @ w.T) * scale[None, :] + shift[None, :], 0.0)
    ref_preds_f32 = hf @ raw["final_w"].T + raw["final_b"][None, :]
    ref_scores_f32 = jnp.max(jax.nn.sigmoid(ref_preds_f32), axis=-1)
    assert jnp.allclose(preds, ref_preds_f32, atol=5e-2, rtol=5e-2)
    assert jnp.allclose(scores, ref_scores_f32, atol=2e-2, rtol=2e-2)

    print("KERNEL_OK")
</pallas_src>

<mosaic_0001>
module attributes {stable_mosaic.version = 11 : i64} {
  func.func @_point_head_kernel(%arg0: i32, %arg1: memref<128x32xf32, #tpu.memory_space<vmem>>, %arg2: memref<32x32xbf16, #tpu.memory_space<vmem>>, %arg3: memref<32x1xf32, #tpu.memory_space<vmem>>, %arg4: memref<32x32xbf16, #tpu.memory_space<vmem>>, %arg5: memref<32x1xf32, #tpu.memory_space<vmem>>, %arg6: memref<8x32xbf16, #tpu.memory_space<vmem>>, %arg7: memref<8x1xf32, #tpu.memory_space<vmem>>, %arg8: memref<8x128xf32, #tpu.memory_space<vmem>>) attributes {dimension_semantics = [#tpu.dimension_semantics<parallel>], iteration_bounds = array<i64: 2>, scalar_prefetch = 0 : i64, scratch_operands = 0 : i64, tpu.core_type = #tpu.core_type<tc>, window_params = [{transform_indices = @transform_0, window_bounds = array<i64: 128, 32>}, {pipeline_mode = #tpu.pipeline_mode<synchronous>, transform_indices = @transform_1, window_bounds = array<i64: 32, 32>}, {pipeline_mode = #tpu.pipeline_mode<synchronous>, transform_indices = @transform_2, window_bounds = array<i64: 32, 1>}, {pipeline_mode = #tpu.pipeline_mode<synchronous>, transform_indices = @transform_3, window_bounds = array<i64: 32, 32>}, {pipeline_mode = #tpu.pipeline_mode<synchronous>, transform_indices = @transform_4, window_bounds = array<i64: 32, 1>}, {pipeline_mode = #tpu.pipeline_mode<synchronous>, transform_indices = @transform_5, window_bounds = array<i64: 8, 32>}, {pipeline_mode = #tpu.pipeline_mode<synchronous>, transform_indices = @transform_6, window_bounds = array<i64: 8, 1>}, {transform_indices = @transform_7, window_bounds = array<i64: 8, 128>}]} {
    %c0 = arith.constant 0 : index
    %c0_0 = arith.constant 0 : index
    %0 = vector.load %arg1[%c0, %c0_0] : memref<128x32xf32, #tpu.memory_space<vmem>>, vector<128x32xf32>
    %1 = tpu.transpose %0, [1, 0] : vector<128x32xf32> -> vector<32x128xf32>
    %2 = arith.truncf %1 : vector<32x128xf32> to vector<32x128xbf16>
    %c0_1 = arith.constant 0 : index
    %c0_2 = arith.constant 0 : index
    %3 = vector.load %arg2[%c0_1, %c0_2] : memref<32x32xbf16, #tpu.memory_space<vmem>>, vector<32x32xbf16>
    %cst = arith.constant dense<0.000000e+00> : vector<32x128xf32>
    %4 = tpu.matmul %3, %2, %cst {dimension_numbers = #tpu.dot_dimension_numbers<[1], [0], [0], [1], [0, 0, 1, 1], [], []>} : vector<32x32xbf16>, vector<32x128xbf16>, vector<32x128xf32> -> vector<32x128xf32>
    %c0_3 = arith.constant 0 : index
    %c0_4 = arith.constant 0 : index
    %5 = vector.load %arg3[%c0_3, %c0_4] : memref<32x1xf32, #tpu.memory_space<vmem>>, vector<32x1xf32>
    %6 = vector.broadcast %5 : vector<32x1xf32> to vector<32x128xf32>
    %7 = arith.addf %4, %6 : vector<32x128xf32>
    %cst_5 = arith.constant 0.000000e+00 : f32
    %8 = vector.broadcast %cst_5 : f32 to vector<32x128xf32>
    %9 = arith.maximumf %7, %8 : vector<32x128xf32>
    %c0_6 = arith.constant 0 : index
    %c0_7 = arith.constant 0 : index
    %10 = vector.load %arg4[%c0_6, %c0_7] : memref<32x32xbf16, #tpu.memory_space<vmem>>, vector<32x32xbf16>
    %11 = arith.truncf %9 : vector<32x128xf32> to vector<32x128xbf16>
    %cst_8 = arith.constant dense<0.000000e+00> : vector<32x128xf32>
    %12 = tpu.matmul %10, %11, %cst_8 {dimension_numbers = #tpu.dot_dimension_numbers<[1], [0], [0], [1], [0, 0, 1, 1], [], []>} : vector<32x32xbf16>, vector<32x128xbf16>, vector<32x128xf32> -> vector<32x128xf32>
    %c0_9 = arith.constant 0 : index
    %c0_10 = arith.constant 0 : index
    %13 = vector.load %arg5[%c0_9, %c0_10] : memref<32x1xf32, #tpu.memory_space<vmem>>, vector<32x1xf32>
    %14 = vector.broadcast %13 : vector<32x1xf32> to vector<32x128xf32>
    %15 = arith.addf %12, %14 : vector<32x128xf32>
    %cst_11 = arith.constant 0.000000e+00 : f32
    %16 = vector.broadcast %cst_11 : f32 to vector<32x128xf32>
    %17 = arith.maximumf %15, %16 : vector<32x128xf32>
    %c0_12 = arith.constant 0 : index
    %c0_13 = arith.constant 0 : index
    %18 = vector.load %arg6[%c0_12, %c0_13] : memref<8x32xbf16, #tpu.memory_space<vmem>>, vector<8x32xbf16>
    %19 = arith.truncf %17 : vector<32x128xf32> to vector<32x128xbf16>
    %cst_14 = arith.constant dense<0.000000e+00> : vector<8x128xf32>
    %20 = tpu.matmul %18, %19, %cst_14 {dimension_numbers = #tpu.dot_dimension_numbers<[1], [0], [0], [1], [0, 0, 1, 1], [], []>} : vector<8x32xbf16>, vector<32x128xbf16>, vector<8x128xf32> -> vector<8x128xf32>
    %c0_15 = arith.constant 0 : index
    %c0_16 = arith.constant 0 : index
    %21 = vector.load %arg7[%c0_15, %c0_16] : memref<8x1xf32, #tpu.memory_space<vmem>>, vector<8x1xf32>
    %22 = vector.broadcast %21 : vector<8x1xf32> to vector<8x128xf32>
    %23 = arith.addf %20, %22 : vector<8x128xf32>
    %cst_17 = arith.constant dense<0xFF800000> : vector<128xf32>
    %24 = vector.multi_reduction <maximumf>, %23, %cst_17 [0] : vector<8x128xf32> to vector<128xf32>
    %25 = vector.shape_cast %24 : vector<128xf32> to vector<1x128xf32>
    %26 = arith.negf %25 : vector<1x128xf32>
    %27 = math.exp %26 : vector<1x128xf32>
    %cst_18 = arith.constant 1.000000e+00 : f32
    %28 = vector.broadcast %cst_18 : f32 to vector<1x128xf32>
    %29 = arith.addf %28, %27 : vector<1x128xf32>
    %30 = arith.divf %28, %29 : vector<1x128xf32>
    %c0_19 = arith.constant 0 : index
    %c0_20 = arith.constant 0 : index
    %31 = vector.load %arg8[%c0_19, %c0_20] : memref<8x128xf32, #tpu.memory_space<vmem>>, vector<8x128xf32>
    tpu.vector_store %arg8[%c0_19, %c0_20], %23 {strides = array<i32>} : memref<8x128xf32, #tpu.memory_space<vmem>>, vector<8x128xf32>,
    %c3 = arith.constant 3 : index
    %c0_21 = arith.constant 0 : index
    %32 = vector.load %arg8[%c3, %c0_21] : memref<8x128xf32, #tpu.memory_space<vmem>>, vector<1x128xf32>
    tpu.vector_store %arg8[%c3, %c0_21], %30 {strides = array<i32>} : memref<8x128xf32, #tpu.memory_space<vmem>>, vector<1x128xf32>,
    return
  }
  func.func @transform_0(%arg0: i32) -> (i32, i32) {
    %c0_i32 = arith.constant 0 : i32
    %c0_i32_0 = arith.constant 0 : i32
    return %arg0, %c0_i32 : i32, i32
  }
  func.func @transform_1(%arg0: i32) -> (i32, i32) {
    %c0_i32 = arith.constant 0 : i32
    %c0_i32_0 = arith.constant 0 : i32
    %c0_i32_1 = arith.constant 0 : i32
    return %c0_i32, %c0_i32_0 : i32, i32
  }
  func.func @transform_2(%arg0: i32) -> (i32, i32) {
    %c0_i32 = arith.constant 0 : i32
    %c0_i32_0 = arith.constant 0 : i32
    %c0_i32_1 = arith.constant 0 : i32
    return %c0_i32, %c0_i32_0 : i32, i32
  }
  func.func @transform_3(%arg0: i32) -> (i32, i32) {
    %c0_i32 = arith.constant 0 : i32
    %c0_i32_0 = arith.constant 0 : i32
    %c0_i32_1 = arith.constant 0 : i32
    return %c0_i32, %c0_i32_0 : i32, i32
  }
  func.func @transform_4(%arg0: i32) -> (i32, i32) {
    %c0_i32 = arith.constant 0 : i32
    %c0_i32_0 = arith.constant 0 : i32
    %c0_i32_1 = arith.constant 0 : i32
    return %c0_i32, %c0_i32_0 : i32, i32
  }
  func.func @transform_5(%arg0: i32) -> (i32, i32) {
    %c0_i32 = arith.constant 0 : i32
    %c0_i32_0 = arith.constant 0 : i32
    %c0_i32_1 = arith.constant 0 : i32
    return %c0_i32, %c0_i32_0 : i32, i32
  }
  func.func @transform_6(%arg0: i32) -> (i32, i32) {
    %c0_i32 = arith.constant 0 : i32
    %c0_i32_0 = arith.constant 0 : i32
    %c0_i32_1 = arith.constant 0 : i32
    return %c0_i32, %c0_i32_0 : i32, i32
  }
  func.func @transform_7(%arg0: i32) -> (i32, i32) {
    %c0_i32 = arith.constant 0 : i32
    %c0_i32_0 = arith.constant 0 : i32
    return %c0_i32, %arg0 : i32, i32
  }
}

</mosaic_0001>

<llo_original>
// kernel: tpu_custom_call.1
$region0: #{tpu_custom_call.1}
  #allocation0 [shape = 'u32[]', space=smem, size = 0x4, offset = 0x4, fixed_abs, tag = 'smem constant byte address 0x4 - core index']
  #allocation1 [shape = 'u32[144,128]{1,0:T(1,128)}', space=vmem, size = 0x12000, scoped, tag = 'internal scratch']
  %s0 = inlined_call_operand.vmem [shape: f32[200,32], index: 0, kind: input, shape index: {}]
  %s1 = inlined_call_operand.vmem [shape: bf16[32,32], index: 1, kind: input, shape index: {}]
  %s2 = inlined_call_operand.vmem [shape: f32[32,1], index: 2, kind: input, shape index: {}]
  %s3 = inlined_call_operand.vmem [shape: bf16[32,32], index: 3, kind: input, shape index: {}]
  %s4 = inlined_call_operand.vmem [shape: f32[32,1], index: 4, kind: input, shape index: {}]
  %s5 = inlined_call_operand.vmem [shape: bf16[8,32], index: 5, kind: input, shape index: {}]
  %s6 = inlined_call_operand.vmem [shape: f32[8,1], index: 6, kind: input, shape index: {}]
  %s7 = inlined_call_operand.hbm [shape: f32[8,200], index: 7, kind: output, shape index: {}]
  %s8 = sld [smem:[#allocation0]]
  $region61: #{tpu_custom_call.1} parent=0
    _
  %s10 = ssub.s32 1, %s8
  %s11 = scalar_select 0, %s10, %s8
  $region1: #{tpu_custom_call.1} parent=0
    #allocation2 [shape = 'u8[8192]{0}', space=vmem, size = 0x2000, scoped, tag = 'output window, operand 0']
    #allocation3 [shape = 's32[2]{0}', space=sflag, size = 0x8, scoped, tag = 'scoped memory for tpu_custom_call.1']
    %12 = vsyncpa [#allocation3], 0
    %s13 = scalar_lea.sflag [#allocation3], 1
    %14 = vsyncpa %s13, 0
    loop: start=0, step=1, limit=4
    $region2: #{tpu_custom_call.1} parent=1 // loop_pre_header
      _
    $region3: #{tpu_custom_call.1} parent=1 // loop_header
      %s16 = sphi 0, %s20
      %p17 = scmp.ge.s32.totalorder %s16, 4
      %s26 = sphi 0, %s28
      %s29 = sphi 0, %s26
      %s30 = sphi 0, %s29
      %s46 = sphi 0, %s30
      %s50 = sphi 0, %s50
      %s52 = sphi 0, %s50
      %s53 = sphi 0, %s52
      %s67 = sphi 0, %s53
      %s71 = sphi 0, %s71
      %s73 = sphi 0, %s71
      %s74 = sphi 0, %s73
      %s88 = sphi 0, %s74
      %s92 = sphi 0, %s92
      %s94 = sphi 0, %s92
      %s95 = sphi 0, %s94
      %s109 = sphi 0, %s95
      %s113 = sphi 0, %s113
      %s115 = sphi 0, %s113
      %s116 = sphi 0, %s115
      %s130 = sphi 0, %s116
      %s134 = sphi 0, %s134
      %s136 = sphi 0, %s134
      %s137 = sphi 0, %s136
      %s151 = sphi 0, %s137
      %s155 = sphi 0, %s155
      %s157 = sphi 0, %s155
      %s158 = sphi 0, %s157
      %s172 = sphi 0, %s158
      %s178 = sphi 0, %s180
      %s181 = sphi 0, %s178
      %s182 = sphi 0, %s181
      %s198 = sphi 0, %s182
    $region4: #{tpu_custom_call.1} parent=1 // loop_header_branch
      %19 = sbr.rel (%p17) target = $region8
    $region5: #{tpu_custom_call.1} parent=1 // loop_body
      %s21 = ssub.s32 %s16, 1
      %s22 = ssub.s32 %s16, 2
      %s23 = sadd.s32 %s16, 1
      %s24 = ssub.s32 %s16, %s23
      %p25 = scmp.eq.s32.totalorder %s24, 0
      %s27 = sadd.s32 %s26, 1
      %s28 = scalar_select %p25, %s26, %s27
      %p31 = pneg %p25
      %p32 = scmp.eq.s32.totalorder %s16, 1
      %p33 = por %p31, %p32
      %p34 = scmp.ne.s32.totalorder %s26, %s29
      %p35 = scmp.eq.s32.totalorder %s16, 0
      %p36 = por %p34, %p35
      %p37 = scmp.ne.s32.totalorder %s26, %s29
      %p38 = scmp.eq.s32.totalorder %s21, 1
      %p39 = por %p37, %p38
      %p40 = scmp.ne.s32.totalorder %s29, %s30
      %p41 = scmp.eq.s32.totalorder %s21, 0
      %p42 = por %p40, %p41
      %p43 = scmp.ne.s32.totalorder %s29, %s30
      %p44 = scmp.eq.s32.totalorder %s22, 1
      %p45 = por %p43, %p44
      %p47 = scmp.ne.s32.totalorder %s30, %s46
      %p48 = scmp.eq.s32.totalorder %s22, 0
      %p49 = por %p47, %p48
      %s51 = sadd.s32 %s50, 1
      %p54 = scmp.eq.s32.totalorder %s16, 1
      %p55 = scmp.ne.s32.totalorder %s50, %s52
      %p56 = scmp.eq.s32.totalorder %s16, 0
      %p57 = por %p55, %p56
      %p58 = scmp.ne.s32.totalorder %s50, %s52
      %p59 = scmp.eq.s32.totalorder %s21, 1
      %p60 = por %p58, %p59
      %p61 = scmp.ne.s32.totalorder %s52, %s53
      %p62 = scmp.eq.s32.totalorder %s21, 0
      %p63 = por %p61, %p62
      %p64 = scmp.ne.s32.totalorder %s52, %s53
      %p65 = scmp.eq.s32.totalorder %s22, 1
      %p66 = por %p64, %p65
      %p68 = scmp.ne.s32.totalorder %s53, %s67
      %p69 = scmp.eq.s32.totalorder %s22, 0
      %p70 = por %p68, %p69
      %s72 = sadd.s32 %s71, 1
      %p75 = scmp.eq.s32.totalorder %s16, 1
      %p76 = scmp.ne.s32.totalorder %s71, %s73
      %p77 = scmp.eq.s32.totalorder %s16, 0
      %p78 = por %p76, %p77
      %p79 = scmp.ne.s32.totalorder %s71, %s73
      %p80 = scmp.eq.s32.totalorder %s21, 1
      %p81 = por %p79, %p80
      %p82 = scmp.ne.s32.totalorder %s73, %s74
      %p83 = scmp.eq.s32.totalorder %s21, 0
      %p84 = por %p82, %p83
      %p85 = scmp.ne.s32.totalorder %s73, %s74
      %p86 = scmp.eq.s32.totalorder %s22, 1
      %p87 = por %p85, %p86
      %p89 = scmp.ne.s32.totalorder %s74, %s88
      %p90 = scmp.eq.s32.totalorder %s22, 0
      %p91 = por %p89, %p90
      %s93 = sadd.s32 %s92, 1
      %p96 = scmp.eq.s32.totalorder %s16, 1
      %p97 = scmp.ne.s32.totalorder %s92, %s94
      %p98 = scmp.eq.s32.totalorder %s16, 0
      %p99 = por %p97, %p98
      %p100 = scmp.ne.s32.totalorder %s92, %s94
      %p101 = scmp.eq.s32.totalorder %s21, 1
      %p102 = por %p100, %p101
      %p103 = scmp.ne.s32.totalorder %s94, %s95
      %p104 = scmp.eq.s32.totalorder %s21, 0
      %p105 = por %p103, %p104
      %p106 = scmp.ne.s32.totalorder %s94, %s95
      %p107 = scmp.eq.s32.totalorder %s22, 1
      %p108 = por %p106, %p107
      %p110 = scmp.ne.s32.totalorder %s95, %s109
      %p111 = scmp.eq.s32.totalorder %s22, 0
      %p112 = por %p110, %p111
      %s114 = sadd.s32 %s113, 1
      %p117 = scmp.eq.s32.totalorder %s16, 1
      %p118 = scmp.ne.s32.totalorder %s113, %s115
      %p119 = scmp.eq.s32.totalorder %s16, 0
      %p120 = por %p118, %p119
      %p121 = scmp.ne.s32.totalorder %s113, %s115
      %p122 = scmp.eq.s32.totalorder %s21, 1
      %p123 = por %p121, %p122
      %p124 = scmp.ne.s32.totalorder %s115, %s116
      %p125 = scmp.eq.s32.totalorder %s21, 0
      %p126 = por %p124, %p125
      %p127 = scmp.ne.s32.totalorder %s115, %s116
      %p128 = scmp.eq.s32.totalorder %s22, 1
      %p129 = por %p127, %p128
      %p131 = scmp.ne.s32.totalorder %s116, %s130
      %p132 = scmp.eq.s32.totalorder %s22, 0
      %p133 = por %p131, %p132
      %s135 = sadd.s32 %s134, 1
      %p138 = scmp.eq.s32.totalorder %s16, 1
      %p139 = scmp.ne.s32.totalorder %s134, %s136
      %p140 = scmp.eq.s32.totalorder %s16, 0
      %p141 = por %p139, %p140
      %p142 = scmp.ne.s32.totalorder %s134, %s136
      %p143 = scmp.eq.s32.totalorder %s21, 1
      %p144 = por %p142, %p143
      %p145 = scmp.ne.s32.totalorder %s136, %s137
      %p146 = scmp.eq.s32.totalorder %s21, 0
      %p147 = por %p145, %p146
      %p148 = scmp.ne.s32.totalorder %s136, %s137
      %p149 = scmp.eq.s32.totalorder %s22, 1
      %p150 = por %p148, %p149
      %p152 = scmp.ne.s32.totalorder %s137, %s151
      %p153 = scmp.eq.s32.totalorder %s22, 0
      %p154 = por %p152, %p153
      %s156 = sadd.s32 %s155, 1
      %p159 = scmp.eq.s32.totalorder %s16, 1
      %p160 = scmp.ne.s32.totalorder %s155, %s157
      %p161 = scmp.eq.s32.totalorder %s16, 0
      %p162 = por %p160, %p161
      %p163 = scmp.ne.s32.totalorder %s155, %s157
      %p164 = scmp.eq.s32.totalorder %s21, 1
      %p165 = por %p163, %p164
      %p166 = scmp.ne.s32.totalorder %s157, %s158
      %p167 = scmp.eq.s32.totalorder %s21, 0
      %p168 = por %p166, %p167
      %p169 = scmp.ne.s32.totalorder %s157, %s158
      %p170 = scmp.eq.s32.totalorder %s22, 1
      %p171 = por %p169, %p170
      %p173 = scmp.ne.s32.totalorder %s158, %s172
      %p174 = scmp.eq.s32.totalorder %s22, 0
      %p175 = por %p173, %p174
      %s176 = ssub.s32 %s16, %s23
      %p177 = scmp.eq.s32.totalorder %s176, 0
      %s179 = sadd.s32 %s178, 1
      %s180 = scalar_select %p177, %s178, %s179
      %p183 = pneg %p177
      %p184 = scmp.eq.s32.totalorder %s16, 1
      %p185 = por %p183, %p184
      %p186 = scmp.ne.s32.totalorder %s178, %s181
      %p187 = scmp.eq.s32.totalorder %s16, 0
      %p188 = por %p186, %p187
      %p189 = scmp.ne.s32.totalorder %s178, %s181
      %p190 = scmp.eq.s32.totalorder %s21, 1
      %p191 = por %p189, %p190
      %p192 = scmp.ne.s32.totalorder %s181, %s182
      %p193 = scmp.eq.s32.totalorder %s21, 0
      %p194 = por %p192, %p193
      %p195 = scmp.ne.s32.totalorder %s181, %s182
      %p196 = scmp.eq.s32.totalorder %s22, 1
      %p197 = por %p195, %p196
      %p199 = scmp.ne.s32.totalorder %s182, %s198
      %p200 = scmp.eq.s32.totalorder %s22, 0
      %p201 = por %p199, %p200
      %p202 = scmp.le.s32.totalorder 1, %s16
      %p203 = scmp.lt.s32.totalorder %s16, 3
      %p204 = pnand %p202, %p203
      %p205 = pneg %p204
      // Predicated region
      $region9: #{tpu_custom_call.1} parent=5 // pred_check
        _
      $region10: #{tpu_custom_call.1} parent=5 // pred_check_branch
        %207 = sbr.rel (%p204) target = $region12
      $region11: #{tpu_custom_call.1} parent=5 // pred_region
        %s208 = ssub.s32 %s16, 1
        // Predicated region
        $region13: #{tpu_custom_call.1} parent=11 // pred_check
          %p209 = pneg %p63
        $region14: #{tpu_custom_call.1} parent=11 // pred_check_branch
          %211 = sbr.rel (%p209) target = $region16
        $region15: #{tpu_custom_call.1} parent=11 // pred_region
          _
        $region16: #{tpu_custom_call.1} parent=11 // pred_fallthru
          _
        // Predicated region
        $region17: #{tpu_custom_call.1} parent=11 // pred_check
          %p212 = pneg %p84
        $region18: #{tpu_custom_call.1} parent=11 // pred_check_branch
          %214 = sbr.rel (%p212) target = $region20
        $region19: #{tpu_custom_call.1} parent=11 // pred_region
          _
        $region20: #{tpu_custom_call.1} parent=11 // pred_fallthru
          _
        // Predicated region
        $region21: #{tpu_custom_call.1} parent=11 // pred_check
          %p215 = pneg %p105
        $region22: #{tpu_custom_call.1} parent=11 // pred_check_branch
          %217 = sbr.rel (%p215) target = $region24
        $region23: #{tpu_custom_call.1} parent=11 // pred_region
          _
        $region24: #{tpu_custom_call.1} parent=11 // pred_fallthru
          _
        // Predicated region
        $region25: #{tpu_custom_call.1} parent=11 // pred_check
          %p218 = pneg %p126
        $region26: #{tpu_custom_call.1} parent=11 // pred_check_branch
          %220 = sbr.rel (%p218) target = $region28
        $region27: #{tpu_custom_call.1} parent=11 // pred_region
          _
        $region28: #{tpu_custom_call.1} parent=11 // pred_fallthru
          _
        // Predicated region
        $region29: #{tpu_custom_call.1} parent=11 // pred_check
          %p221 = pneg %p147
        $region30: #{tpu_custom_call.1} parent=11 // pred_check_branch
          %223 = sbr.rel (%p221) target = $region32
        $region31: #{tpu_custom_call.1} parent=11 // pred_region
          _
        $region32: #{tpu_custom_call.1} parent=11 // pred_fallthru
          _
        // Predicated region
        $region33: #{tpu_custom_call.1} parent=11 // pred_check
          %p224 = pneg %p168
        $region34: #{tpu_custom_call.1} parent=11 // pred_check_branch
          %226 = sbr.rel (%p224) target = $region36
        $region35: #{tpu_custom_call.1} parent=11 // pred_region
          _
        $region36: #{tpu_custom_call.1} parent=11 // pred_fallthru
          _
      $region12: #{tpu_custom_call.1} parent=5 // pred_fallthru
        _
      %p227 = scmp.lt.s32.totalorder %s16, 2
      // Predicated region
      $region37: #{tpu_custom_call.1} parent=5 // pred_check
        %p228 = pneg %p227
      $region38: #{tpu_custom_call.1} parent=5 // pred_check_branch
        %230 = sbr.rel (%p228) target = $region40
      $region39: #{tpu_custom_call.1} parent=5 // pred_region
        // Predicated region
        $region41: #{tpu_custom_call.1} parent=39 // pred_check
          %p231 = pneg %p36
        $region42: #{tpu_custom_call.1} parent=39 // pred_check_branch
          %233 = sbr.rel (%p231) target = $region44
        $region43: #{tpu_custom_call.1} parent=39 // pred_region
          %s234 = smul.u32 16, %s16
          %s235 = ssub.s32 25, %s234
          %p236 = scmp.lt.s32.totalorder %s235, 16
          %s237 = scalar_select %p236, %s235, 16
          %s238 = smul.u32 128, %s237
          %p239 = scmp.lt.s32.totalorder %s234, 24
          %s240 = scalar_select %p239, %s234, 24
          %s241 = smul.addr %s240, 8
          %s242 = scalar_lea.vmem %s0, %s241
          %s243 = smul.u32 16, %s16
          %s244 = ssub.s32 25, %s243
          %p245 = scmp.lt.s32.totalorder %s244, 16
          %s246 = scalar_select %p245, %s244, 16
          %s247 = smul.u32 128, %s246
        $region44: #{tpu_custom_call.1} parent=39 // pred_fallthru
          _
      $region40: #{tpu_custom_call.1} parent=5 // pred_fallthru
        _
      %p248 = scmp.le.s32.totalorder 1, %s16
      %p249 = scmp.lt.s32.totalorder %s16, 3
      %p250 = pnand %p248, %p249
      %p251 = pneg %p250
      // Predicated region
      $region45: #{tpu_custom_call.1} parent=5 // pred_check
        _
      $region46: #{tpu_custom_call.1} parent=5 // pred_check_branch
        %253 = sbr.rel (%p250) target = $region48
      $region47: #{tpu_custom_call.1} parent=5 // pred_region
        %s254 = ssub.s32 %s16, 1
        %s255 = smul.u32 16, %s21
        %s256 = ssub.s32 25, %s255
        %p257 = scmp.lt.s32.totalorder %s256, 16
        %s258 = scalar_select %p257, %s256, 16
        %s259 = smul.u32 128, %s258
        %p260 = scmp.lt.s32.totalorder %s255, 24
        %s261 = scalar_select %p260, %s255, 24
        %s262 = smul.addr %s261, 8
        %s263 = scalar_lea.vmem %s0, %s262
        %p264 = pneg %p42
        %p265 = pneg %p39
        %p266 = pneg %p63
        %p267 = pneg %p60
        %p268 = pneg %p84
        %p269 = pneg %p81
        %p270 = pneg %p105
        %p271 = pneg %p102
        %p272 = pneg %p126
        %p273 = pneg %p123
        %p274 = pneg %p147
        %p275 = pneg %p144
        %p276 = pneg %p168
        %p277 = pneg %p165
        %p278 = pneg %p194
        %p279 = pneg %p191
        %s280 = sand.u32 %s181, 1
        %s281 = scalar_lea.sflag [#allocation3], %s280
        %s282 = sand.u32 %s181, 1
        %s283 = smul.addr %s282, 8
        %s284 = scalar_lea.vmem [#allocation2], %s283
        %s285 = smul.u32 16, %s21
        %s286 = ssub.s32 25, %s285
        %p287 = scmp.lt.s32.totalorder %s286, 16
        %s288 = scalar_select %p287, %s286, 16
        %s289 = smul.u32 128, %s288
        %p290 = scmp.lt.s32.totalorder %s285, 24
        %s291 = scalar_select %p290, %s285, 24
        %s292 = smul.addr %s291, 8
        %s293 = scalar_lea.vmem %s0, %s292
        %s294 = smul.u32 16, %s21
        %s295 = ssub.s32 25, %s294
        %p296 = scmp.lt.s32.totalorder %s295, 16
        %s297 = scalar_select %p296, %s295, 16
        %s298 = smul.u32 128, %s297
        %v300 = vld [vmem:[%s293] sm:$0xff]
        %v301 = vld [vmem:[%s293 + $0x8] sm:$0xff]
        %v302 = vld [vmem:[%s293 + $0x10] sm:$0xff]
        %v303 = vld [vmem:[%s293 + $0x18] sm:$0xff]
        %v304 = vld [vmem:[%s293 + $0x20] sm:$0xff]
        %v305 = vld [vmem:[%s293 + $0x28] sm:$0xff]
        %v306 = vld [vmem:[%s293 + $0x30] sm:$0xff]
        %v307 = vld [vmem:[%s293 + $0x38] sm:$0xff]
        %v308 = vld [vmem:[%s293 + $0x40] sm:$0xff]
        %v309 = vld [vmem:[%s293 + $0x48] sm:$0xff]
        %v310 = vld [vmem:[%s293 + $0x50] sm:$0xff]
        %v311 = vld [vmem:[%s293 + $0x58] sm:$0xff]
        %v312 = vld [vmem:[%s293 + $0x60] sm:$0xff]
        %v313 = vld [vmem:[%s293 + $0x68] sm:$0xff]
        %v314 = vld [vmem:[%s293 + $0x70] sm:$0xff]
        %v315 = vld [vmem:[%s293 + $0x78] sm:$0xff]
        %316 = vxpose.xlu0.b32.start [1/16] %v300, 128
        %317 = vxpose.xlu0.b32.cont [2/16] %v301, 128
        %318 = vxpose.xlu0.b32.cont [3/16] %v302, 128
        %319 = vxpose.xlu0.b32.cont [4/16] %v303, 128
        %320 = vxpose.xlu0.b32.cont [5/16] %v304, 128
        %321 = vxpose.xlu0.b32.cont [6/16] %v305, 128
        %322 = vxpose.xlu0.b32.cont [7/16] %v306, 128
        %323 = vxpose.xlu0.b32.cont [8/16] %v307, 128
        %324 = vxpose.xlu0.b32.cont [9/16] %v308, 128
        %325 = vxpose.xlu0.b32.cont [10/16] %v309, 128
        %326 = vxpose.xlu0.b32.cont [11/16] %v310, 128
        %327 = vxpose.xlu0.b32.cont [12/16] %v311, 128
        %328 = vxpose.xlu0.b32.cont [13/16] %v312, 128
        %329 = vxpose.xlu0.b32.cont [14/16] %v313, 128
        %330 = vxpose.xlu0.b32.cont [15/16] %v314, 128
        %331 = vxpose.xlu0.b32.end [16/16] %v315, 128
        %v332 = vpop.trf.xlu0
        %v333 = vpop.trf.xlu0
        %v334 = vpop.trf.xlu0
        %v335 = vpop.trf.xlu0
        %v336 = vpop.trf.xlu0
        %v337 = vpop.trf.xlu0
        %v338 = vpop.trf.xlu0
        %v339 = vpop.trf.xlu0
        %v340 = vpop.trf.xlu0
        %v341 = vpop.trf.xlu0
        %v342 = vpop.trf.xlu0
        %v343 = vpop.trf.xlu0
        %v344 = vpop.trf.xlu0
        %v345 = vpop.trf.xlu0
        %v346 = vpop.trf.xlu0
        %v347 = vpop.trf.xlu0
        %v348 = vpack.c.bf16 %v333, %v332
        %v349 = vpack.c.bf16 %v335, %v334
        %v350 = vld [vmem:[%s1] sm:$0xf]
        %v351 = vld [vmem:[%s1 + $0x4] sm:$0xf]
        %v352 = vld [vmem:[%s1 + $0x8] sm:$0xf]
        %v353 = vld [vmem:[%s1 + $0xc] sm:$0xf]
        %v354 = vld [vmem:[%s2] sm:$0xff]
        %v355 = vld [vmem:[%s2 + $0x8] sm:$0xff]
        %v356 = vld [vmem:[%s2 + $0x10] sm:$0xff]
        %v357 = vld [vmem:[%s2 + $0x18] sm:$0xff]
        %359 = vset.pattern.permute.xlu0 0
        %360 = vperm.xlu0 %359, %v354
        %v361 = vpop.permute.xlu0 %360
        %364 = vset.pattern.permute.xlu0 0
        %365 = vperm.xlu0 %364, %v355
        %v366 = vpop.permute.xlu0 %365
        %369 = vset.pattern.permute.xlu0 0
        %370 = vperm.xlu0 %369, %v356
        %v371 = vpop.permute.xlu0 %370
        %374 = vset.pattern.permute.xlu0 0
        %375 = vperm.xlu0 %374, %v357
        %v376 = vpop.permute.xlu0 %375
        %v382 = vunpack.c.l.b16 %v350
        %v383 = vunpack.c.l.b16 %v351
        %v384 = vunpack.c.l.b16 %v352
        %v385 = vunpack.c.l.b16 %v353
        %v386 = vpack.c.b16 %v383, %v382
        %v387 = vpack.c.b16 %v385, %v384
        %vm388 = vcmask 261120
        %v390 = vsel %vm388, %v386, 0
        %v393 = vsel %vm388, %v387, 0
        %395 = vmatprep.subr.bf16.mxu0 0
        %396 = vmatpush1.bf16.msra.mxu0 %v348
        %397 = vmatprep.subr.bf16.mxu0 0
        %398 = vmatpush1.bf16.msra.mxu0 %v349
        %399 = vmatprep.subr.bf16.mxu0 0
        %400 = vmatpush1.bf16.msra.mxu0 0
        %401 = vmatprep.subr.bf16.mxu0 0
        %402 = vmatpush1.bf16.msra.mxu0 0
        %403 = vmatprep.subr.bf16.mxu0 0
        %404 = vmatpush1.bf16.msra.mxu0 0
        %405 = vmatprep.subr.bf16.mxu0 0
        %406 = vmatpush1.bf16.msra.mxu0 0
        %407 = vmatprep.subr.bf16.mxu0 0
        %408 = vmatpush1.bf16.msra.mxu0 0
        %409 = vmatprep.subr.bf16.mxu0 0
        %410 = vmatpush1.bf16.msra.mxu0 0
        %411 = vmatprep.subr.bf16.mxu0 0
        %412 = vmatpush1.bf16.msra.mxu0 0
        %413 = vmatprep.subr.bf16.mxu0 0
        %414 = vmatpush1.bf16.msra.mxu0 0
        %415 = vmatprep.subr.bf16.mxu0 0
        %416 = vmatpush1.bf16.msra.mxu0 0
        %417 = vmatprep.subr.bf16.mxu0 0
        %418 = vmatpush1.bf16.msra.mxu0 0
        %419 = vmatprep.subr.bf16.mxu0 0
        %420 = vmatpush1.bf16.msra.mxu0 0
        %421 = vmatprep.subr.bf16.mxu0 0
        %422 = vmatpush1.bf16.msra.mxu0 0
        %423 = vmatprep.subr.bf16.mxu0 0
        %424 = vmatpush1.bf16.msra.mxu0 0
        %425 = vmatprep.subr.bf16.mxu0 0
        %426 = vmatpush1.bf16.msra.mxu0 0
        %427 = vmatprep.mubr.bf16.mxu0 0
        %428 = vmatmul.mubr.bf16.gmra.mrb[0].mxu0 %v390
        %v429 = vpop.f32.mrb[0].mxu0
        %v430 = vadd.f32 %v361, %v429
        %v431 = vpop.f32.mrb[0].mxu0
        %v432 = vpop.f32.mrb[0].mxu0
        %v433 = vadd.f32 %v366, %v432
        %v434 = vpop.f32.mrb[0].mxu0
        %435 = vmatprep.mubr.bf16.mxu0 0
        %436 = vmatmul.mubr.bf16.gmra.mrb[0].mxu0 %v393
        %v437 = vpop.f32.mrb[0].mxu0
        %v438 = vadd.f32 %v371, %v437
        %v439 = vpop.f32.mrb[0].mxu0
        %v440 = vpop.f32.mrb[0].mxu0
        %v441 = vadd.f32 %v376, %v440
        %v442 = vpop.f32.mrb[0].mxu0
        %443 = vdwg.mxu0
        %v444 = vmax.f32 %v430, 0.0
        %v445 = vmax.f32 %v433, 0.0
        %v446 = vmax.f32 %v438, 0.0
        %v447 = vmax.f32 %v441, 0.0
        %v448 = vld [vmem:[%s3] sm:$0xf]
        %v449 = vld [vmem:[%s3 + $0x4] sm:$0xf]
        %v450 = vld [vmem:[%s3 + $0x8] sm:$0xf]
        %v451 = vld [vmem:[%s3 + $0xc] sm:$0xf]
        %v452 = vpack.c.bf16 %v445, %v444
        %v453 = vpack.c.bf16 %v447, %v446
        %v454 = vld [vmem:[%s4] sm:$0xff]
        %v455 = vld [vmem:[%s4 + $0x8] sm:$0xff]
        %v456 = vld [vmem:[%s4 + $0x10] sm:$0xff]
        %v457 = vld [vmem:[%s4 + $0x18] sm:$0xff]
        %459 = vset.pattern.permute.xlu0 0
        %460 = vperm.xlu0 %459, %v454
        %v461 = vpop.permute.xlu0 %460
        %464 = vset.pattern.permute.xlu0 0
        %465 = vperm.xlu0 %464, %v455
        %v466 = vpop.permute.xlu0 %465
        %469 = vset.pattern.permute.xlu0 0
        %470 = vperm.xlu0 %469, %v456
        %v471 = vpop.permute.xlu0 %470
        %474 = vset.pattern.permute.xlu0 0
        %475 = vperm.xlu0 %474, %v457
        %v476 = vpop.permute.xlu0 %475
        %v482 = vunpack.c.l.b16 %v448
        %v483 = vunpack.c.l.b16 %v449
        %v484 = vunpack.c.l.b16 %v450
        %v485 = vunpack.c.l.b16 %v451
        %v486 = vpack.c.b16 %v483, %v482
        %v487 = vpack.c.b16 %v485, %v484
        %v489 = vsel %vm388, %v486, 0
        %v492 = vsel %vm388, %v487, 0
        %494 = vmatprep.subr.bf16.mxu0 0
        %495 = vmatpush1.bf16.msra.mxu0 %v452
        %496 = vmatprep.subr.bf16.mxu0 0
        %497 = vmatpush1.bf16.msra.mxu0 %v453
        %498 = vmatprep.subr.bf16.mxu0 0
        %499 = vmatpush1.bf16.msra.mxu0 0
        %500 = vmatprep.subr.bf16.mxu0 0
        %501 = vmatpush1.bf16.msra.mxu0 0
        %502 = vmatprep.subr.bf16.mxu0 0
        %503 = vmatpush1.bf16.msra.mxu0 0
        %504 = vmatprep.subr.bf16.mxu0 0
        %505 = vmatpush1.bf16.msra.mxu0 0
        %506 = vmatprep.subr.bf16.mxu0 0
        %507 = vmatpush1.bf16.msra.mxu0 0
        %508 = vmatprep.subr.bf16.mxu0 0
        %509 = vmatpush1.bf16.msra.mxu0 0
        %510 = vmatprep.subr.bf16.mxu0 0
        %511 = vmatpush1.bf16.msra.mxu0 0
        %512 = vmatprep.subr.bf16.mxu0 0
        %513 = vmatpush1.bf16.msra.mxu0 0
        %514 = vmatprep.subr.bf16.mxu0 0
        %515 = vmatpush1.bf16.msra.mxu0 0
        %516 = vmatprep.subr.bf16.mxu0 0
        %517 = vmatpush1.bf16.msra.mxu0 0
        %518 = vmatprep.subr.bf16.mxu0 0
        %519 = vmatpush1.bf16.msra.mxu0 0
        %520 = vmatprep.subr.bf16.mxu0 0
        %521 = vmatpush1.bf16.msra.mxu0 0
        %522 = vmatprep.subr.bf16.mxu0 0
        %523 = vmatpush1.bf16.msra.mxu0 0
        %524 = vmatprep.subr.bf16.mxu0 0
        %525 = vmatpush1.bf16.msra.mxu0 0
        %526 = vmatprep.mubr.bf16.mxu0 0
        %527 = vmatmul.mubr.bf16.gmra.mrb[0].mxu0 %v489
        %v528 = vpop.f32.mrb[0].mxu0
        %v529 = vadd.f32 %v461, %v528
        %v530 = vpop.f32.mrb[0].mxu0
        %v531 = vpop.f32.mrb[0].mxu0
        %v532 = vadd.f32 %v466, %v531
        %v533 = vpop.f32.mrb[0].mxu0
        %534 = vmatprep.mubr.bf16.mxu0 0
        %535 = vmatmul.mubr.bf16.gmra.mrb[0].mxu0 %v492
        %v536 = vpop.f32.mrb[0].mxu0
        %v537 = vadd.f32 %v471, %v536
        %v538 = vpop.f32.mrb[0].mxu0
        %v539 = vpop.f32.mrb[0].mxu0
        %v540 = vadd.f32 %v476, %v539
        %v541 = vpop.f32.mrb[0].mxu0
        %542 = vdwg.mxu0
        %v543 = vmax.f32 %v529, 0.0
        %v544 = vmax.f32 %v532, 0.0
        %v545 = vmax.f32 %v537, 0.0
        %v546 = vmax.f32 %v540, 0.0
        %v547 = vld [vmem:[%s5] sm:$0xf]
        %v548 = vpack.c.bf16 %v544, %v543
        %v549 = vpack.c.bf16 %v546, %v545
        %v550 = vld [vmem:[%s6] sm:$0xff]
        %552 = vset.pattern.permute.xlu0 0
        %553 = vperm.xlu0 %552, %v550
        %v554 = vpop.permute.xlu0 %553
        %v557 = vsel %vm388, %v547, 0
        %559 = vmatprep.subr.bf16.mxu0 0
        %560 = vmatpush1.bf16.msra.mxu0 %v548
        %561 = vmatprep.subr.bf16.mxu0 0
        %562 = vmatpush1.bf16.msra.mxu0 %v549
        %563 = vmatprep.subr.bf16.mxu0 0
        %564 = vmatpush1.bf16.msra.mxu0 0
        %565 = vmatprep.subr.bf16.mxu0 0
        %566 = vmatpush1.bf16.msra.mxu0 0
        %567 = vmatprep.subr.bf16.mxu0 0
        %568 = vmatpush1.bf16.msra.mxu0 0
        %569 = vmatprep.subr.bf16.mxu0 0
        %570 = vmatpush1.bf16.msra.mxu0 0
        %571 = vmatprep.subr.bf16.mxu0 0
        %572 = vmatpush1.bf16.msra.mxu0 0
        %573 = vmatprep.subr.bf16.mxu0 0
        %574 = vmatpush1.bf16.msra.mxu0 0
        %575 = vmatprep.subr.bf16.mxu0 0
        %576 = vmatpush1.bf16.msra.mxu0 0
        %577 = vmatprep.subr.bf16.mxu0 0
        %578 = vmatpush1.bf16.msra.mxu0 0
        %579 = vmatprep.subr.bf16.mxu0 0
        %580 = vmatpush1.bf16.msra.mxu0 0
        %581 = vmatprep.subr.bf16.mxu0 0
        %582 = vmatpush1.bf16.msra.mxu0 0
        %583 = vmatprep.subr.bf16.mxu0 0
        %584 = vmatpush1.bf16.msra.mxu0 0
        %585 = vmatprep.subr.bf16.mxu0 0
        %586 = vmatpush1.bf16.msra.mxu0 0
        %587 = vmatprep.subr.bf16.mxu0 0
        %588 = vmatpush1.bf16.msra.mxu0 0
        %589 = vmatprep.subr.bf16.mxu0 0
        %590 = vmatpush1.bf16.msra.mxu0 0
        %591 = vmatprep.mubr.bf16.mxu0 0
        %592 = vmatmul.mubr.bf16.gmra.mrb[0].mxu0 %v557
        %v593 = vpop.f32.mrb[0].mxu0
        %v594 = vadd.f32 %v554, %v593
        %v595 = vpop.f32.mrb[0].mxu0
        %v596 = vpop.f32.mrb[0].mxu0
        %v597 = vpop.f32.mrb[0].mxu0
        %598 = vdwg.mxu0
        %v599 = vrot.slane %v594, 4
        %v600 = vmax.f32 %v594, %v599
        %v601 = vrot.slane %v600, 2
        %v602 = vmax.f32 %v600, %v601
        %v603 = vrot.slane %v602, 1
        %v604 = vmax.f32 %v602, %v603
        %v605 = vxor.u32 %v604, 2147483648
        %v606 = vmul.f32 %v605, 1.442695
        %v607 = vpow.pop %v606
        %v608 = vadd.f32 %v607, 1.0
        %v609 = vrcp.pop %v608
        %v610 = vmul.f32 1.0, %v609
        %611 = vst [vmem:[%s284] sm:$0xff] %v594
        %612 = vst [vmem:[%s284 + $0x3] sm:$0x1] %v610
        %s613 = sand.u32 %s181, 1
        %s614 = scalar_lea.sflag [#allocation3], %s613
        %s615 = sand.u32 %s181, 1
        %s616 = smul.addr %s615, 8
        %s617 = scalar_lea.vmem [#allocation2], %s616
        // Predicated region
        $region49: #{tpu_custom_call.1} parent=47 // pred_check
          %p618 = pneg %p191
        $region50: #{tpu_custom_call.1} parent=47 // pred_check_branch
          %620 = sbr.rel (%p618) target = $region52
        $region51: #{tpu_custom_call.1} parent=47 // pred_region
          %s622 = ssub.s32 128, 128
          %623 = vsyncadd %s614, %s622
          %s624 = smul.addr %s21, 128
          %s625 = scalar_lea.hbm %s7, %s624
          %s627 = sshll.u32 %s617, 4
          %s628 = int_to_ptr.vmem [resolvable:$true] %s627
          %630 = dma.vmem_to_hbm [thread:$0]  %s628, 128, %s625, %s614
        $region52: #{tpu_custom_call.1} parent=47 // pred_fallthru
          _
      $region48: #{tpu_custom_call.1} parent=5 // pred_fallthru
        _
      %p631 = scmp.le.s32.totalorder 2, %s16
      // Predicated region
      $region53: #{tpu_custom_call.1} parent=5 // pred_check
        %p632 = pneg %p631
      $region54: #{tpu_custom_call.1} parent=5 // pred_check_branch
        %634 = sbr.rel (%p632) target = $region56
      $region55: #{tpu_custom_call.1} parent=5 // pred_region
        %s635 = ssub.s32 %s16, 2
        // Predicated region
        $region57: #{tpu_custom_call.1} parent=55 // pred_check
          %p636 = pneg %p197
        $region58: #{tpu_custom_call.1} parent=55 // pred_check_branch
          %638 = sbr.rel (%p636) target = $region60
        $region59: #{tpu_custom_call.1} parent=55 // pred_region
          %s639 = sand.u32 %s182, 1
          %s640 = scalar_lea.sflag [#allocation3], %s639
          %s641 = sand.u32 %s182, 1
          %s642 = smul.addr %s641, 8
          %s643 = scalar_lea.vmem [#allocation2], %s642
          %644 = dma.done %s640, 128
        $region60: #{tpu_custom_call.1} parent=55 // pred_fallthru
          _
      $region56: #{tpu_custom_call.1} parent=5 // pred_fallthru
        _
    $region6: #{tpu_custom_call.1} parent=1 // loop_footer
      %s20 = sadd.s32 1, %s16
    $region7: #{tpu_custom_call.1} parent=1 // loop_footer_branch
      %15 = sbr.rel target = $region3
    $region8: #{tpu_custom_call.1} parent=1 // loop_exit
      _
    %645 = vsyncpa [#allocation3], 1
    %s646 = scalar_lea.sflag [#allocation3], 1
    %647 = vsyncpa %s646, 1

</llo_original>
